<compile_context>
chip_gen: v7x
topology: tpu7x:2x2x1
jax: 0.10.0
libtpu: 0.0.40
codegen_flags: <defaults>
</compile_context>

<pallas_src>
import functools
import math

import jax
import jax.numpy as jnp
from jax.experimental import pallas as pl
from jax.experimental.pallas import tpu as pltpu


# ------------------------------ helpers -------------------------------------

def _round_up(x, m):
    return (x + m - 1) // m * m


def _pick_row_tile(m, target=256):
    """Largest tile <= target dividing m; prefer >=2 grid steps (keeps TCs busy)."""
    cands = sorted({c for c in (target, 512, 256, 128, 64, 32, 16, 8) if c <= m},
                   reverse=True)
    for c in cands:
        if m % c == 0 and m // c >= 2:
            return c
    for c in cands:
        if m % c == 0:
            return c
    return m


def _cparams(n_grid_dims):
    return pltpu.CompilerParams(
        dimension_semantics=("parallel",) * n_grid_dims,
        vmem_limit_bytes=48 * 1024 * 1024)


# ------------------------------ Pallas kernels -------------------------------

def _linear_kernel(x_ref, w_ref, b_ref, o_ref):
    acc = jnp.dot(x_ref[...], w_ref[...], preferred_element_type=jnp.float32)
    o_ref[...] = (acc + b_ref[...]).astype(o_ref.dtype)


def _linear_nobias_kernel(x_ref, w_ref, o_ref):
    o_ref[...] = jnp.dot(x_ref[...], w_ref[...],
                         preferred_element_type=jnp.float32).astype(o_ref.dtype)


def linear(x, w, b=None, out_dtype=jnp.float32):
    m, k = x.shape
    k2, n = w.shape
    assert k == k2
    tm = _pick_row_tile(m)
    grid = (m // tm,)
    x_spec = pl.BlockSpec((tm, k), lambda i: (i, 0))
    w_spec = pl.BlockSpec((k, n), lambda i: (0, 0))
    o_spec = pl.BlockSpec((tm, n), lambda i: (i, 0))
    if b is None:
        return pl.pallas_call(
            _linear_nobias_kernel,
            grid=grid,
            out_shape=jax.ShapeDtypeStruct((m, n), out_dtype),
            in_specs=[x_spec, w_spec],
            out_specs=o_spec,
            compiler_params=_cparams(1),
        )(x, w)
    return pl.pallas_call(
        _linear_kernel,
        grid=grid,
        out_shape=jax.ShapeDtypeStruct((m, n), out_dtype),
        in_specs=[x_spec, w_spec, pl.BlockSpec((1, n), lambda i: (0, 0))],
        out_specs=o_spec,
        compiler_params=_cparams(1),
    )(x, w, b.reshape(1, n).astype(jnp.float32))


def _layernorm_kernel(x_ref, g_ref, b_ref, o_ref):
    x = x_ref[...].astype(jnp.float32)
    mu = jnp.mean(x, axis=-1, keepdims=True)
    var = jnp.mean(jnp.square(x - mu), axis=-1, keepdims=True)
    o_ref[...] = ((x - mu) * jax.lax.rsqrt(var + 1e-5) * g_ref[...]
                  + b_ref[...]).astype(o_ref.dtype)


def layernorm(x, g, b, out_dtype=jnp.bfloat16):
    m, d = x.shape
    tm = _pick_row_tile(m)
    return pl.pallas_call(
        _layernorm_kernel,
        grid=(m // tm,),
        out_shape=jax.ShapeDtypeStruct((m, d), out_dtype),
        in_specs=[pl.BlockSpec((tm, d), lambda i: (i, 0)),
                  pl.BlockSpec((1, d), lambda i: (0, 0)),
                  pl.BlockSpec((1, d), lambda i: (0, 0))],
        out_specs=pl.BlockSpec((tm, d), lambda i: (i, 0)),
        compiler_params=_cparams(1),
    )(x, g.reshape(1, d), b.reshape(1, d))


def _ln_linear_kernel(x_ref, g_ref, bln_ref, w_ref, b_ref, o_ref):
    # LN(x) @ W + b, LN in fp32, matmul inputs bf16, fp32 accumulation.
    x = x_ref[...].astype(jnp.float32)
    mu = jnp.mean(x, axis=-1, keepdims=True)
    var = jnp.mean(jnp.square(x - mu), axis=-1, keepdims=True)
    h = (x - mu) * jax.lax.rsqrt(var + 1e-5) * g_ref[...] + bln_ref[...]
    acc = jnp.dot(h.astype(w_ref.dtype), w_ref[...],
                  preferred_element_type=jnp.float32)
    o_ref[...] = (acc + b_ref[...]).astype(o_ref.dtype)


def ln_linear(x, g, bln, w, b, out_dtype=jnp.bfloat16):
    m, d = x.shape
    _, n = w.shape
    tm = _pick_row_tile(m)
    return pl.pallas_call(
        _ln_linear_kernel,
        grid=(m // tm,),
        out_shape=jax.ShapeDtypeStruct((m, n), out_dtype),
        in_specs=[pl.BlockSpec((tm, d), lambda i: (i, 0)),
                  pl.BlockSpec((1, d), lambda i: (0, 0)),
                  pl.BlockSpec((1, d), lambda i: (0, 0)),
                  pl.BlockSpec((d, n), lambda i: (0, 0)),
                  pl.BlockSpec((1, n), lambda i: (0, 0))],
        out_specs=pl.BlockSpec((tm, n), lambda i: (i, 0)),
        compiler_params=_cparams(1),
    )(x, g.reshape(1, d), bln.reshape(1, d), w, b.reshape(1, n))


def _linear_residual_kernel(x_ref, w_ref, b_ref, res_ref, o_ref):
    acc = jnp.dot(x_ref[...], w_ref[...], preferred_element_type=jnp.float32)
    o_ref[...] = (acc + b_ref[...]
                  + res_ref[...].astype(jnp.float32)).astype(o_ref.dtype)


def linear_residual(x, w, b, res, out_dtype=jnp.bfloat16):
    m, k = x.shape
    _, n = w.shape
    tm = _pick_row_tile(m)
    return pl.pallas_call(
        _linear_residual_kernel,
        grid=(m // tm,),
        out_shape=jax.ShapeDtypeStruct((m, n), out_dtype),
        in_specs=[pl.BlockSpec((tm, k), lambda i: (i, 0)),
                  pl.BlockSpec((k, n), lambda i: (0, 0)),
                  pl.BlockSpec((1, n), lambda i: (0, 0)),
                  pl.BlockSpec((tm, n), lambda i: (i, 0))],
        out_specs=pl.BlockSpec((tm, n), lambda i: (i, 0)),
        compiler_params=_cparams(1),
    )(x, w, b.reshape(1, n), res)


def _attn_core_kernel(scale, l_valid, q_ref, k_ref, v_ref, o_ref):
    # One (batch, head) tile: softmax(q k^T / sqrt(hd)) v with padded keys masked.
    q = q_ref[0, 0]                                    # [Lp, hd] bf16
    k = k_ref[0, 0]
    v = v_ref[0, 0]
    s = jax.lax.dot_general(q, k, (((1,), (1,)), ((), ())),
                            preferred_element_type=jnp.float32) * scale
    key_ids = jax.lax.broadcasted_iota(jnp.int32, s.shape, 1)
    s = jnp.where(key_ids < l_valid, s, -1e30)
    s = s - jnp.max(s, axis=-1, keepdims=True)
    e = jnp.exp(s)
    p = e * pl.reciprocal(jnp.sum(e, axis=-1, keepdims=True), approx=True)
    ctx = jnp.dot(p.astype(v.dtype), v, preferred_element_type=jnp.float32)
    o_ref[0, 0] = ctx.astype(o_ref.dtype)


def attention_core(q, k, v, l_valid, out_dtype=jnp.bfloat16):
    b, h, lp, hd = q.shape
    scale = 1.0 / math.sqrt(hd)
    kern = functools.partial(_attn_core_kernel, scale, l_valid)
    spec = pl.BlockSpec((1, 1, lp, hd), lambda bi, hi: (bi, hi, 0, 0))
    return pl.pallas_call(
        kern,
        grid=(b, h),
        out_shape=jax.ShapeDtypeStruct((b, h, lp, hd), out_dtype),
        in_specs=[spec, spec, spec],
        out_specs=spec,
        compiler_params=_cparams(2),
    )(q, k, v)


def _mlp_block_kernel(x_ref, g_ref, bln_ref, wfc_ref, bfc_ref, wpr_ref, bpr_ref,
                      o_ref):
    # x + W_proj(QuickGELU(W_fc(LN(x)) + b_fc)) + b_proj, row-wise.
    x = x_ref[...].astype(jnp.float32)
    mu = jnp.mean(x, axis=-1, keepdims=True)
    var = jnp.mean(jnp.square(x - mu), axis=-1, keepdims=True)
    h = (x - mu) * jax.lax.rsqrt(var + 1e-5) * g_ref[...] + bln_ref[...]
    m = jnp.dot(h.astype(wfc_ref.dtype), wfc_ref[...],
                preferred_element_type=jnp.float32) + bfc_ref[...]
    m = m * pl.reciprocal(1.0 + jnp.exp(-1.702 * m), approx=True)   # QuickGELU
    y = jnp.dot(m.astype(wpr_ref.dtype), wpr_ref[...],
                preferred_element_type=jnp.float32) + bpr_ref[...]
    o_ref[...] = (x + y).astype(o_ref.dtype)


def mlp_block(x, g, bln, wfc, bfc, wpr, bpr, out_dtype=jnp.bfloat16):
    rows, d = x.shape
    _, df = wfc.shape
    tm = _pick_row_tile(rows)
    return pl.pallas_call(
        _mlp_block_kernel,
        grid=(rows // tm,),
        out_shape=jax.ShapeDtypeStruct((rows, d), out_dtype),
        in_specs=[pl.BlockSpec((tm, d), lambda i: (i, 0)),
                  pl.BlockSpec((1, d), lambda i: (0, 0)),
                  pl.BlockSpec((1, d), lambda i: (0, 0)),
                  pl.BlockSpec((d, df), lambda i: (0, 0)),
                  pl.BlockSpec((1, df), lambda i: (0, 0)),
                  pl.BlockSpec((df, d), lambda i: (0, 0)),
                  pl.BlockSpec((1, d), lambda i: (0, 0))],
        out_specs=pl.BlockSpec((tm, d), lambda i: (i, 0)),
        compiler_params=_cparams(1),
    )(x, g.reshape(1, d), bln.reshape(1, d), wfc, bfc.reshape(1, df),
      wpr, bpr.reshape(1, d))


# --------------------------- transformer layer --------------------------------

def transformer_layer(x, layer, num_heads, l_valid):
    b, l_pad, d = x.shape
    hd = d // num_heads
    rows = b * l_pad
    x2 = x.reshape(rows, d)

    # (1) ln_1 + fused qkv projection (row-tiled)
    qkv = ln_linear(x2, layer["ln1_g"], layer["ln1_b"],
                    layer["wqkv"], layer["bqkv"])                 # [rows, 3D] bf16

    # (2) head split is wrapper-side layout plumbing; heads go on the grid
    qkv = qkv.reshape(b, l_pad, 3, num_heads, hd).transpose(2, 0, 3, 1, 4)
    ctx = attention_core(qkv[0], qkv[1], qkv[2], l_valid)         # [B, H, Lp, hd]
    ctx = ctx.transpose(0, 2, 1, 3).reshape(rows, d)

    # (3) output projection + residual
    x2 = linear_residual(ctx, layer["wo"], layer["bo"], x2)

    # (4) ln_2 + QuickGELU MLP + residual
    x2 = mlp_block(x2, layer["ln2_g"], layer["ln2_b"], layer["wfc"],
                   layer["bfc"], layer["wpr"], layer["bpr"])
    return x2.reshape(b, l_pad, d)


# ------------------------------ parameter init --------------------------------

def init_params(key, *, C, P, D, heads, layers, embed_dim, n_class, seq_len):
    # TODO(synk): pretrained CLIP weights (clip.load) cannot be downloaded
    # in-sandbox; parameters are randomly initialized with matching shapes.
    ks = iter(jax.random.split(key, 8 + 6 * layers))

    def nrm(shape, scale=0.02, dtype=jnp.bfloat16):
        return (scale * jax.random.normal(next(ks), shape, jnp.float32)).astype(dtype)

    ep = _round_up(embed_dim, 128)      # lane-dense projection output
    nc = _round_up(n_class, 128)        # lane-dense classifier output

    proj = nrm((D, embed_dim), D ** -0.5)
    head_w = nrm((embed_dim, n_class))

    params = dict(
        patch_size=P, width=D, heads=heads,
        embed_dim=embed_dim, n_class=n_class,
        # conv1 weight [D, C, P, P] stored as [C*P*P, D] (bf16)
        w_patch=nrm((C * P * P, D), D ** -0.5),
        class_emb=nrm((D,), D ** -0.5, jnp.float32),
        pos_emb=nrm((seq_len, D), D ** -0.5, jnp.float32),
        ln_pre_g=jnp.ones((D,), jnp.float32),
        ln_pre_b=jnp.zeros((D,), jnp.float32),
        ln_post_g=jnp.ones((D,), jnp.float32),
        ln_post_b=jnp.zeros((D,), jnp.float32),
        # zero-padded to multiples of 128 lanes; padding sliced off in wrapper
        proj=jnp.zeros((D, ep), jnp.bfloat16).at[:, :embed_dim].set(proj),
        head_w=jnp.zeros((ep, nc), jnp.bfloat16).at[:embed_dim, :n_class].set(head_w),
        head_b=jnp.zeros((nc,), jnp.float32),
        layers=[],
    )
    for _ in range(layers):
        params["layers"].append(dict(
            ln1_g=jnp.ones((D,), jnp.float32),
            ln1_b=jnp.zeros((D,), jnp.float32),
            wqkv=nrm((D, 3 * D)), bqkv=jnp.zeros((3 * D,), jnp.float32),
            wo=nrm((D, D)), bo=jnp.zeros((D,), jnp.float32),
            ln2_g=jnp.ones((D,), jnp.float32),
            ln2_b=jnp.zeros((D,), jnp.float32),
            wfc=nrm((D, 4 * D)), bfc=jnp.zeros((4 * D,), jnp.float32),
            wpr=nrm((4 * D, D)), bpr=jnp.zeros((D,), jnp.float32),
        ))
    return params


# --------------------------------- forward ------------------------------------

def clip_image_encoder(image, params):
    # image is NCHW [B, C, H, W] (PyTorch convention).
    b, c, hh, ww = image.shape
    p = params["patch_size"]
    d = params["width"]
    gh, gw = hh // p, ww // p
    n_patch = gh * gw
    l = n_patch + 1
    l_pad = _round_up(l, 8)     # full sublane tiles; padded keys masked in attention

    # conv1 (kernel=stride=patch, no bias) == patch extraction + matmul (bias-less)
    patches = image.reshape(b, c, gh, p, gw, p)
    patches = patches.transpose(0, 2, 4, 1, 3, 5).reshape(b * n_patch, c * p * p)
    x = linear(patches.astype(jnp.bfloat16), params["w_patch"],
               out_dtype=jnp.float32)                       # [B*NP, D]
    x = x.reshape(b, n_patch, d)

    # prepend class token, add positional embedding, pad sequence (glue)
    cls_tok = jnp.broadcast_to(params["class_emb"][None, None, :], (b, 1, d))
    x = jnp.concatenate([cls_tok, x], axis=1) + params["pos_emb"][None]
    x = jnp.pad(x, ((0, 0), (0, l_pad - l), (0, 0)))        # [B, Lp, D]

    # ln_pre (row-tiled)
    x = layernorm(x.reshape(b * l_pad, d), params["ln_pre_g"],
                  params["ln_pre_b"]).reshape(b, l_pad, d)  # bf16

    # transformer blocks
    for layer in params["layers"]:
        x = transformer_layer(x, layer, params["heads"], l)

    # ln_post on CLS token, project to (lane-padded) embed_dim, no bias
    cls = x[:, 0, :]                                        # [B, D] bf16
    cls = layernorm(cls, params["ln_post_g"], params["ln_post_b"])
    feat = linear(cls, params["proj"], out_dtype=jnp.bfloat16)

    # cls_head (lane-padded classes; slice padding off)
    logits = linear(feat, params["head_w"], params["head_b"],
                    out_dtype=jnp.float32)
    return logits[:, :params["n_class"]]


# ----------------------------------- main --------------------------------------

if __name__ == "__main__":
    # small, ViT-consistent shapes
    B, C, RES, P = 2, 3, 16, 8        # grid 2x2 -> 4 patches, seq = 5 (padded to 8)
    D, HEADS, LAYERS = 32, 2, 2       # width 32, 2 heads (head_dim 16), 2 blocks
    EMBED_DIM, N_CLASS = 24, 10
    SEQ = (RES // P) ** 2 + 1

    key = jax.random.PRNGKey(0)
    k_img, k_par = jax.random.split(key)
    image = jax.random.normal(k_img, (B, C, RES, RES), jnp.float32)

    params = init_params(k_par, C=C, P=P, D=D, heads=HEADS, layers=LAYERS,
                         embed_dim=EMBED_DIM, n_class=N_CLASS, seq_len=SEQ)

    out = clip_image_encoder(image, params)
    out = jax.block_until_ready(out)
    assert out.shape == (B, N_CLASS) and out.dtype == jnp.float32
    print("KERNEL_OK")
</pallas_src>

<mosaic_0001>
module attributes {stable_mosaic.version = 11 : i64} {
  func.func @_linear_nobias_kernel(%arg0: i32, %arg1: memref<8x192xbf16, #tpu.memory_space<vmem>>, %arg2: memref<192x32xbf16, #tpu.memory_space<vmem>>, %arg3: memref<8x32xf32, #tpu.memory_space<vmem>>) attributes {dimension_semantics = [#tpu.dimension_semantics<parallel>], iteration_bounds = array<i64: 1>, scalar_prefetch = 0 : i64, scratch_operands = 0 : i64, tpu.core_type = #tpu.core_type<tc>, window_params = [{transform_indices = @transform_0, window_bounds = array<i64: 8, 192>}, {pipeline_mode = #tpu.pipeline_mode<synchronous>, transform_indices = @transform_1, window_bounds = array<i64: 192, 32>}, {transform_indices = @transform_2, window_bounds = array<i64: 8, 32>}]} {
    %c0 = arith.constant 0 : index
    %c0_0 = arith.constant 0 : index
    %0 = vector.load %arg1[%c0, %c0_0] : memref<8x192xbf16, #tpu.memory_space<vmem>>, vector<8x192xbf16>
    %c0_1 = arith.constant 0 : index
    %c0_2 = arith.constant 0 : index
    %1 = vector.load %arg2[%c0_1, %c0_2] : memref<192x32xbf16, #tpu.memory_space<vmem>>, vector<192x32xbf16>
    %cst = arith.constant dense<0.000000e+00> : vector<8x32xf32>
    %2 = tpu.matmul %0, %1, %cst {dimension_numbers = #tpu.dot_dimension_numbers<[1], [0], [0], [1], [0, 0, 1, 1], [], []>} : vector<8x192xbf16>, vector<192x32xbf16>, vector<8x32xf32> -> vector<8x32xf32>
    %c0_3 = arith.constant 0 : index
    %c0_4 = arith.constant 0 : index
    %3 = vector.load %arg3[%c0_3, %c0_4] : memref<8x32xf32, #tpu.memory_space<vmem>>, vector<8x32xf32>
    tpu.vector_store %arg3[%c0_3, %c0_4], %2 {strides = array<i32>} : memref<8x32xf32, #tpu.memory_space<vmem>>, vector<8x32xf32>,
    return
  }
  func.func @transform_0(%arg0: i32) -> (i32, i32) {
    %c0_i32 = arith.constant 0 : i32
    %c0_i32_0 = arith.constant 0 : i32
    return %arg0, %c0_i32 : i32, i32
  }
  func.func @transform_1(%arg0: i32) -> (i32, i32) {
    %c0_i32 = arith.constant 0 : i32
    %c0_i32_0 = arith.constant 0 : i32
    %c0_i32_1 = arith.constant 0 : i32
    return %c0_i32, %c0_i32_0 : i32, i32
  }
  func.func @transform_2(%arg0: i32) -> (i32, i32) {
    %c0_i32 = arith.constant 0 : i32
    %c0_i32_0 = arith.constant 0 : i32
    return %arg0, %c0_i32 : i32, i32
  }
}

</mosaic_0001>

<llo_original>
// kernel: tpu_custom_call.1
$region0: #{tpu_custom_call.1}
  #allocation0 [shape = 'u32[]', space=smem, size = 0x4, offset = 0x4, fixed_abs, tag = 'smem constant byte address 0x4 - core index']
  #allocation1 [shape = 'u32[144,128]{1,0:T(1,128)}', space=vmem, size = 0x12000, scoped, tag = 'internal scratch']
  %s0 = inlined_call_operand.vmem [shape: bf16[8,192], index: 0, kind: input, shape index: {}]
  %s1 = inlined_call_operand.vmem [shape: bf16[192,32], index: 1, kind: input, shape index: {}]
  %s2 = inlined_call_operand.hbm [shape: f32[8,32], index: 2, kind: output, shape index: {}]
  %s3 = sld [smem:[#allocation0]]
  $region18: #{tpu_custom_call.1} parent=0
    _
  %s5 = ssub.s32 1, %s3
  %s6 = scalar_select 0, %s5, %s3
  $region1: #{tpu_custom_call.1} parent=0
    #allocation2 [shape = 'u8[4096]{0}', space=vmem, size = 0x1000, scoped, tag = 'output window, operand 0, single buffered']
    #allocation3 [shape = 's32[1]{0}', space=sflag, size = 0x4, scoped, tag = 'scoped memory for tpu_custom_call.1']
    %7 = vsyncpa [#allocation3], 0
    // Predicated region
    $region2: #{tpu_custom_call.1} parent=1 // pred_check
      _
    $region3: #{tpu_custom_call.1} parent=1 // pred_check_branch
      %9 = sbr.rel (0) target = $region5
    $region4: #{tpu_custom_call.1} parent=1 // pred_region
      _
    $region5: #{tpu_custom_call.1} parent=1 // pred_fallthru
      _
    // Predicated region
    $region6: #{tpu_custom_call.1} parent=1 // pred_check
      _
    $region7: #{tpu_custom_call.1} parent=1 // pred_check_branch
      %11 = sbr.rel (0) target = $region9
    $region8: #{tpu_custom_call.1} parent=1 // pred_region
      _
    $region9: #{tpu_custom_call.1} parent=1 // pred_fallthru
      _
    %v13 = vld [vmem:[%s0] sm:$0xff]
    %v14 = vld [vmem:[%s1] sm:$0xf]
    %v15 = vld [vmem:[%s1 + $0x4] sm:$0xf]
    %v16 = vld [vmem:[%s1 + $0x8] sm:$0xf]
    %v17 = vld [vmem:[%s1 + $0xc] sm:$0xf]
    %v18 = vld [vmem:[%s1 + $0x10] sm:$0xf]
    %v19 = vld [vmem:[%s1 + $0x14] sm:$0xf]
    %v20 = vld [vmem:[%s1 + $0x18] sm:$0xf]
    %v21 = vld [vmem:[%s1 + $0x1c] sm:$0xf]
    %v22 = vld [vmem:[%s1 + $0x20] sm:$0xf]
    %v23 = vld [vmem:[%s1 + $0x24] sm:$0xf]
    %v24 = vld [vmem:[%s1 + $0x28] sm:$0xf]
    %v25 = vld [vmem:[%s1 + $0x2c] sm:$0xf]
    %v26 = vld [vmem:[%s1 + $0x30] sm:$0xf]
    %v27 = vld [vmem:[%s1 + $0x34] sm:$0xf]
    %v28 = vld [vmem:[%s1 + $0x38] sm:$0xf]
    %v29 = vld [vmem:[%s1 + $0x3c] sm:$0xf]
    %v30 = vld [vmem:[%s1 + $0x40] sm:$0xf]
    %v31 = vld [vmem:[%s1 + $0x44] sm:$0xf]
    %v32 = vld [vmem:[%s1 + $0x48] sm:$0xf]
    %v33 = vld [vmem:[%s1 + $0x4c] sm:$0xf]
    %v34 = vld [vmem:[%s1 + $0x50] sm:$0xf]
    %v35 = vld [vmem:[%s1 + $0x54] sm:$0xf]
    %v36 = vld [vmem:[%s1 + $0x58] sm:$0xf]
    %v37 = vld [vmem:[%s1 + $0x5c] sm:$0xf]
    %v39 = vunpack.c.l.b16 %v13
    %v40 = vunpack.c.h.b16 %v13
    %v41 = vpack.c.b16 %v39, %v39
    %v42 = vpack.c.b16 %v40, %v40
    %v68 = vunpack.c.l.b16 %v14
    %v69 = vunpack.c.l.b16 %v15
    %v70 = vunpack.c.l.b16 %v16
    %v71 = vunpack.c.l.b16 %v17
    %v72 = vunpack.c.l.b16 %v18
    %v73 = vunpack.c.l.b16 %v19
    %v74 = vunpack.c.l.b16 %v20
    %v75 = vunpack.c.l.b16 %v21
    %v76 = vunpack.c.l.b16 %v22
    %v77 = vunpack.c.l.b16 %v23
    %v78 = vunpack.c.l.b16 %v24
    %v79 = vunpack.c.l.b16 %v25
    %v80 = vunpack.c.l.b16 %v26
    %v81 = vunpack.c.l.b16 %v27
    %v82 = vunpack.c.l.b16 %v28
    %v83 = vunpack.c.l.b16 %v29
    %v84 = vunpack.c.l.b16 %v30
    %v85 = vunpack.c.l.b16 %v31
    %v86 = vunpack.c.l.b16 %v32
    %v87 = vunpack.c.l.b16 %v33
    %v88 = vunpack.c.l.b16 %v34
    %v89 = vunpack.c.l.b16 %v35
    %v90 = vunpack.c.l.b16 %v36
    %v91 = vunpack.c.l.b16 %v37
    %v92 = vpack.c.b16 %v69, %v68
    %v93 = vpack.c.b16 %v71, %v70
    %v94 = vpack.c.b16 %v73, %v72
    %v95 = vpack.c.b16 %v75, %v74
    %v96 = vpack.c.b16 %v77, %v76
    %v97 = vpack.c.b16 %v79, %v78
    %v98 = vpack.c.b16 %v81, %v80
    %v99 = vpack.c.b16 %v83, %v82
    %v100 = vpack.c.b16 %v85, %v84
    %v101 = vpack.c.b16 %v87, %v86
    %v102 = vpack.c.b16 %v89, %v88
    %v103 = vpack.c.b16 %v91, %v90
    %vm116 = vcmask 523264
    %v118 = vsel %vm116, %v42, 0
    %120 = vmatprep.subr.bf16.mxu0 0
    %121 = vmatpush1.bf16.msra.mxu0 %v92
    %122 = vmatprep.subr.bf16.mxu0 0
    %123 = vmatpush1.bf16.msra.mxu0 %v93
    %124 = vmatprep.subr.bf16.mxu0 0
    %125 = vmatpush1.bf16.msra.mxu0 %v94
    %126 = vmatprep.subr.bf16.mxu0 0
    %127 = vmatpush1.bf16.msra.mxu0 %v95
    %128 = vmatprep.subr.bf16.mxu0 0
    %129 = vmatpush1.bf16.msra.mxu0 %v96
    %130 = vmatprep.subr.bf16.mxu0 0
    %131 = vmatpush1.bf16.msra.mxu0 %v97
    %132 = vmatprep.subr.bf16.mxu0 0
    %133 = vmatpush1.bf16.msra.mxu0 %v98
    %134 = vmatprep.subr.bf16.mxu0 0
    %135 = vmatpush1.bf16.msra.mxu0 %v99
    %136 = vmatprep.subr.bf16.mxu0 0
    %137 = vmatpush1.bf16.msra.mxu0 %v100
    %138 = vmatprep.subr.bf16.mxu0 0
    %139 = vmatpush1.bf16.msra.mxu0 %v101
    %140 = vmatprep.subr.bf16.mxu0 0
    %141 = vmatpush1.bf16.msra.mxu0 %v102
    %142 = vmatprep.subr.bf16.mxu0 0
    %143 = vmatpush1.bf16.msra.mxu0 %v103
    %144 = vmatprep.subr.bf16.mxu0 0
    %145 = vmatpush1.bf16.msra.mxu0 0
    %146 = vmatprep.subr.bf16.mxu0 0
    %147 = vmatpush1.bf16.msra.mxu0 0
    %148 = vmatprep.subr.bf16.mxu0 0
    %149 = vmatpush1.bf16.msra.mxu0 0
    %150 = vmatprep.subr.bf16.mxu0 0
    %151 = vmatpush1.bf16.msra.mxu0 0
    %152 = vmatprep.mubr.bf16.mxu0 %v118
    %153 = vmatmul.mubr.bf16.gmra.mrb[0].mxu0 %v41
    %v154 = vpop.f32.mrb[0].mxu0
    %v155 = vadd.f32 0.0, %v154
    %v156 = vpop.f32.mrb[0].mxu0
    %v157 = vpop.f32.mrb[0].mxu0
    %v158 = vpop.f32.mrb[0].mxu0
    %159 = vdwg.mxu0
    %vm160 = vcmask 261120
    %161 = vst.msk [vmem:[#allocation2] sm:$0xff] %vm160, %v155
    // Predicated region
    $region10: #{tpu_custom_call.1} parent=1 // pred_check
      _
    $region11: #{tpu_custom_call.1} parent=1 // pred_check_branch
      %163 = sbr.rel (0) target = $region13
    $region12: #{tpu_custom_call.1} parent=1 // pred_region
      %s165 = ssub.s32 128, 128
      %166 = vsyncadd [#allocation3], %s165
      %s168 = sshll.u32 [#allocation2], 4
      %s169 = int_to_ptr.vmem [resolvable:$true] %s168
      %171 = dma.vmem_to_hbm [thread:$0]  %s169, 128, %s2, [#allocation3]
    $region13: #{tpu_custom_call.1} parent=1 // pred_fallthru
      _
    // Predicated region
    $region14: #{tpu_custom_call.1} parent=1 // pred_check
      _
    $region15: #{tpu_custom_call.1} parent=1 // pred_check_branch
      %173 = sbr.rel (0) target = $region17
    $region16: #{tpu_custom_call.1} parent=1 // pred_region
      %174 = dma.done [#allocation3], 128
    $region17: #{tpu_custom_call.1} parent=1 // pred_fallthru
      _
    %175 = vsyncpa [#allocation3], 1

</llo_original>
